<compile_context>
chip_gen: v5e
topology: v5e:2x2
jax: 0.10.0
libtpu: 0.0.40
codegen_flags: <defaults>
</compile_context>

<pallas_src>
import functools
import math

import jax
import jax.numpy as jnp
from jax.experimental import pallas as pl
from jax.experimental.pallas import tpu as pltpu


def _round_up(x, m):
    return -(-x // m) * m


def _fold_group_sum(v, count, w):
    """Exact f32 sum of `count` contiguous width-`w` groups along the lane axis.

    Pairwise folding: log2(count) passes of f32 adds over geometrically
    shrinking data, so VPU cost is ~2x the block elements — far below the HBM
    roofline — and the result is exact (no MXU precision questions).
    """
    rows = v.shape[0]
    tail = jnp.zeros((rows, w), jnp.float32)
    while count > 1:
        if count % 2 == 1:                      # peel the odd trailing group
            tail = tail + v[:, (count - 1) * w: count * w].astype(jnp.float32)
            count -= 1
        half = count // 2
        v = (v[:, : half * w].astype(jnp.float32)
             + v[:, half * w: count * w].astype(jnp.float32))
        count = half
    return v.astype(jnp.float32) + tail


def _gap_kernel(x_ref, o_ref, acc_ref, *, w, lt, hw_total, inv_h):
    # x_ref: (pb, lt) slab of the flattened (P, H*W) input
    # o_ref: (pb, w) output block; acc_ref: (pb, w) f32 accumulator scratch
    k = pl.program_id(1)

    @pl.when(k == 0)
    def _():
        acc_ref[...] = jnp.zeros_like(acc_ref)

    v = x_ref[...]
    if hw_total % lt != 0:
        # Partial last H*W tile: zero the out-of-range lanes (exact, NaN-safe).
        lane = jax.lax.broadcasted_iota(jnp.int32, v.shape, 1)
        valid = hw_total - k * lt
        v = jnp.where(lane < valid, v, jnp.zeros_like(v))

    acc_ref[...] += _fold_group_sum(v, lt // w, w)

    @pl.when(k == pl.num_programs(1) - 1)
    def _():
        o_ref[...] = (acc_ref[...] * inv_h).astype(o_ref.dtype)


def _plan_blocks(p, h, w, itemsize, target_bytes):
    """Pick (planes per block, lane tile, #lane tiles, sublane quantum) using
    the PADDED VMEM footprint of a block, not its logical size."""
    hw = h * w
    sub = max(8, 32 // itemsize)                    # sublane quantum per dtype
    plane_bytes = _round_up(hw, 128) * itemsize     # padded bytes of one plane row
    if plane_bytes * sub <= target_bytes:
        # Whole planes per block: spend the budget on the plane axis.
        lt = hw
        pb = target_bytes // plane_bytes
        if pb < p:
            pb = max(sub, (pb // sub) * sub)        # tile-aligned block dim
        pb = min(pb, p)                             # pb == p is always legal
    else:
        # A single (padded) plane is already large: tile the flattened H*W axis.
        pb = min(p, sub)
        quantum = (w * 128) // math.gcd(w, 128)     # multiple of both w and 128
        if quantum >= hw:
            lt = hw
        else:
            lanes = max(quantum,
                        (target_bytes // (pb * itemsize)) // quantum * quantum)
            lt = min(lanes, (hw // quantum) * quantum)
    n_hw = pl.cdiv(hw, lt)
    return pb, lt, n_hw, sub


def global_average_pooling(x, *, target_block_bytes=8 << 20):
    """x: (N, C, H, W) -> AvgPool2d((H, 1)) -> squeeze(1) (only if C == 1)."""
    n, c, h, w = x.shape
    p = n * c
    hw = h * w
    itemsize = x.dtype.itemsize
    xp = x.reshape(p, hw)                           # free, contiguous flatten

    pb, lt, n_hw, sub = _plan_blocks(p, h, w, itemsize, target_block_bytes)
    grid = (pl.cdiv(p, pb), n_hw)

    # Scoped-VMEM budget from the padded, double-buffered footprints.
    in_buf = _round_up(pb, sub) * _round_up(lt, 128) * itemsize
    out_buf = _round_up(pb, sub) * _round_up(w, 128) * itemsize
    acc_buf = _round_up(pb, 8) * _round_up(w, 128) * 4
    vmem_limit = int(min(max(2 * in_buf + 2 * out_buf + acc_buf + (2 << 20),
                             32 << 20), 64 << 20))

    kernel = functools.partial(_gap_kernel, w=w, lt=lt, hw_total=hw, inv_h=1.0 / h)

    pooled = pl.pallas_call(
        kernel,
        out_shape=jax.ShapeDtypeStruct((p, w), x.dtype),
        grid_spec=pltpu.PrefetchScalarGridSpec(
            num_scalar_prefetch=0,
            grid=grid,
            in_specs=[pl.BlockSpec((pb, lt), lambda i, k: (i, k))],
            out_specs=pl.BlockSpec((pb, w), lambda i, k: (i, 0)),
            scratch_shapes=[pltpu.VMEM((pb, w), jnp.float32)],
        ),
        compiler_params=pltpu.CompilerParams(
            dimension_semantics=("parallel", "arbitrary"),
            vmem_limit_bytes=vmem_limit,
        ),
        cost_estimate=pl.CostEstimate(
            flops=p * hw,
            transcendentals=0,
            bytes_accessed=p * hw * itemsize + p * w * itemsize,
        ),
    )(xp)

    # Restore PyTorch output layout: (N, C, 1, W), then squeeze(1) iff C == 1.
    pooled = pooled.reshape(n, c, 1, w)
    if pooled.shape[1] == 1:
        pooled = jnp.squeeze(pooled, axis=1)
    return pooled


def _reference(x):
    ref = jnp.mean(x.astype(jnp.float32), axis=2, keepdims=True).astype(x.dtype)
    if ref.shape[1] == 1:
        ref = jnp.squeeze(ref, axis=1)
    return ref


if __name__ == "__main__":
    key = jax.random.PRNGKey(0)
    k0, k1, k2 = jax.random.split(key, 3)

    # 1) Typical usage: C == 1 so squeeze(1) removes the channel axis.
    x = jax.random.normal(k0, (2, 1, 16, 16), dtype=jnp.float32)
    out = jax.block_until_ready(global_average_pooling(x))
    ref = _reference(x)
    assert out.shape == ref.shape, (out.shape, ref.shape)
    assert jnp.allclose(out, ref, atol=1e-5, rtol=1e-5)

    # 2) Multi-channel + tiny block budget: exercises multiple plane blocks
    #    (partial last block), the H*W-tiled "arbitrary" reduction axis with a
    #    masked partial last tile, and the f32 accumulator path.
    x2 = jax.random.normal(k1, (2, 5, 10, 16), dtype=jnp.float32)
    out2 = jax.block_until_ready(
        global_average_pooling(x2, target_block_bytes=2048))
    ref2 = _reference(x2)
    assert out2.shape == ref2.shape, (out2.shape, ref2.shape)
    assert jnp.allclose(out2, ref2, atol=1e-5, rtol=1e-5)

    # 3) bf16 input: exercises dtype-aware sublane handling + f32 accumulation.
    x3 = jax.random.normal(k2, (3, 2, 16, 16), dtype=jnp.bfloat16)
    out3 = jax.block_until_ready(global_average_pooling(x3))
    ref3 = _reference(x3)
    assert out3.shape == ref3.shape, (out3.shape, ref3.shape)
    assert jnp.allclose(out3.astype(jnp.float32), ref3.astype(jnp.float32),
                        atol=2e-2, rtol=2e-2)

    print("KERNEL_OK")
</pallas_src>

<mosaic_0001>
module attributes {stable_mosaic.version = 11 : i64} {
  func.func @_gap_kernel(%arg0: i32, %arg1: i32, %arg2: memref<2x256xf32, #tpu.memory_space<vmem>>, %arg3: memref<2x16xf32, #tpu.memory_space<vmem>>, %arg4: memref<2x16xf32, #tpu.memory_space<vmem>>) attributes {dimension_semantics = [#tpu.dimension_semantics<parallel>, #tpu.dimension_semantics<arbitrary>], iteration_bounds = array<i64: 1, 1>, scalar_prefetch = 0 : i64, scratch_operands = 1 : i64, tpu.core_type = #tpu.core_type<tc>, window_params = [{transform_indices = @transform_0, window_bounds = array<i64: 2, 256>}, {transform_indices = @transform_1, window_bounds = array<i64: 2, 16>}]} {
    %c0_i32 = arith.constant 0 : i32
    %0 = arith.cmpi eq, %arg1, %c0_i32 : i32
    %1 = arith.extui %0 : i1 to i32
    %c0_i32_0 = arith.constant 0 : i32
    %2 = arith.cmpi ne, %1, %c0_i32_0 : i32
    scf.if %2 {
      %cst_8 = arith.constant 0.000000e+00 : f32
      %24 = vector.broadcast %cst_8 : f32 to vector<2x16xf32>
      %c0_9 = arith.constant 0 : index
      %c0_10 = arith.constant 0 : index
      %25 = vector.load %arg4[%c0_9, %c0_10] : memref<2x16xf32, #tpu.memory_space<vmem>>, vector<2x16xf32>
      tpu.vector_store %arg4[%c0_9, %c0_10], %24 {strides = array<i32>} : memref<2x16xf32, #tpu.memory_space<vmem>>, vector<2x16xf32>,
    } else {
    }
    %c0 = arith.constant 0 : index
    %c0_1 = arith.constant 0 : index
    %3 = vector.load %arg2[%c0, %c0_1] : memref<2x256xf32, #tpu.memory_space<vmem>>, vector<2x256xf32>
    %c0_2 = arith.constant 0 : index
    %c0_3 = arith.constant 0 : index
    %4 = vector.load %arg4[%c0_2, %c0_3] : memref<2x16xf32, #tpu.memory_space<vmem>>, vector<2x16xf32>
    %cst = arith.constant 0.000000e+00 : f32
    %5 = vector.broadcast %cst : f32 to vector<2x16xf32>
    %6 = vector.extract_strided_slice %3 {offsets = [0, 0], sizes = [2, 128], strides = [1, 1]} : vector<2x256xf32> to vector<2x128xf32>
    %7 = vector.extract_strided_slice %3 {offsets = [0, 128], sizes = [2, 128], strides = [1, 1]} : vector<2x256xf32> to vector<2x128xf32>
    %8 = arith.addf %6, %7 : vector<2x128xf32>
    %9 = vector.extract_strided_slice %8 {offsets = [0, 0], sizes = [2, 64], strides = [1, 1]} : vector<2x128xf32> to vector<2x64xf32>
    %10 = vector.extract_strided_slice %8 {offsets = [0, 64], sizes = [2, 64], strides = [1, 1]} : vector<2x128xf32> to vector<2x64xf32>
    %11 = arith.addf %9, %10 : vector<2x64xf32>
    %12 = vector.extract_strided_slice %11 {offsets = [0, 0], sizes = [2, 32], strides = [1, 1]} : vector<2x64xf32> to vector<2x32xf32>
    %13 = vector.extract_strided_slice %11 {offsets = [0, 32], sizes = [2, 32], strides = [1, 1]} : vector<2x64xf32> to vector<2x32xf32>
    %14 = arith.addf %12, %13 : vector<2x32xf32>
    %15 = vector.extract_strided_slice %14 {offsets = [0, 0], sizes = [2, 16], strides = [1, 1]} : vector<2x32xf32> to vector<2x16xf32>
    %16 = vector.extract_strided_slice %14 {offsets = [0, 16], sizes = [2, 16], strides = [1, 1]} : vector<2x32xf32> to vector<2x16xf32>
    %17 = arith.addf %15, %16 : vector<2x16xf32>
    %18 = arith.addf %17, %5 : vector<2x16xf32>
    %19 = arith.addf %4, %18 : vector<2x16xf32>
    %c0_4 = arith.constant 0 : index
    %c0_5 = arith.constant 0 : index
    %20 = vector.load %arg4[%c0_4, %c0_5] : memref<2x16xf32, #tpu.memory_space<vmem>>, vector<2x16xf32>
    tpu.vector_store %arg4[%c0_4, %c0_5], %19 {strides = array<i32>} : memref<2x16xf32, #tpu.memory_space<vmem>>, vector<2x16xf32>,
    %c0_i32_6 = arith.constant 0 : i32
    %21 = arith.cmpi eq, %arg1, %c0_i32_6 : i32
    %22 = arith.extui %21 : i1 to i32
    %c0_i32_7 = arith.constant 0 : i32
    %23 = arith.cmpi ne, %22, %c0_i32_7 : i32
    scf.if %23 {
      %c0_8 = arith.constant 0 : index
      %c0_9 = arith.constant 0 : index
      %24 = vector.load %arg4[%c0_8, %c0_9] : memref<2x16xf32, #tpu.memory_space<vmem>>, vector<2x16xf32>
      %cst_10 = arith.constant 6.250000e-02 : f32
      %25 = vector.broadcast %cst_10 : f32 to vector<2x16xf32>
      %26 = arith.mulf %24, %25 : vector<2x16xf32>
      %c0_11 = arith.constant 0 : index
      %c0_12 = arith.constant 0 : index
      %27 = vector.load %arg3[%c0_11, %c0_12] : memref<2x16xf32, #tpu.memory_space<vmem>>, vector<2x16xf32>
      tpu.vector_store %arg3[%c0_11, %c0_12], %26 {strides = array<i32>} : memref<2x16xf32, #tpu.memory_space<vmem>>, vector<2x16xf32>,
    } else {
    }
    return
  }
  func.func @transform_0(%arg0: i32, %arg1: i32) -> (i32, i32) {
    %c0_i32 = arith.constant 0 : i32
    return %arg0, %arg1 : i32, i32
  }
  func.func @transform_1(%arg0: i32, %arg1: i32) -> (i32, i32) {
    %c0_i32 = arith.constant 0 : i32
    %c0_i32_0 = arith.constant 0 : i32
    return %arg0, %c0_i32 : i32, i32
  }
}

</mosaic_0001>

<llo_original>
// kernel: tpu_custom_call.1
$region0: #{tpu_custom_call.1}
  #allocation0 [shape = 'u32[]', space=smem, size = 0x4, offset = 0x4, fixed_abs, tag = 'smem constant byte address 0x4 - core index']
  #allocation1 [shape = 'u32[72,128]{1,0:T(1,128)}', space=vmem, size = 0x9000, scoped, tag = 'internal scratch']
  #allocation2 [shape = 'f32[2,16]{1,0:T(2,128)}', space=vmem, size = 0x400, scoped, tag = 'scratch operand']
  %s0 = inlined_call_operand.hbm [shape: f32[2,256], index: 0, kind: input, shape index: {}]
  %s1 = inlined_call_operand.hbm [shape: f32[2,16], index: 1, kind: output, shape index: {}]
  %s2 = sld [smem:[#allocation0]]
  $region26: #{tpu_custom_call.1} parent=0
    _
  %s4 = ssub.s32 1, %s2
  %s5 = scalar_select 0, %s4, %s2
  $region1: #{tpu_custom_call.1} parent=0
    #allocation3 [shape = 'u8[2048]{0}', space=vmem, size = 0x800, scoped, tag = 'input window, operand 0, single buffered']
    #allocation4 [shape = 's32[1]{0}', space=sflag, size = 0x4, scoped, tag = 'scoped memory for tpu_custom_call.1']
    #allocation5 [shape = 's32[1]{0}', space=sflag, size = 0x4, scoped, tag = 'scoped memory for tpu_custom_call.1']
    #allocation6 [shape = 'u8[1024]{0}', space=vmem, size = 0x400, scoped, tag = 'output window, operand 0, single buffered']
    %6 = vsyncpa [#allocation4], 0
    %7 = vsyncpa [#allocation5], 0
    // Predicated region
    $region2: #{tpu_custom_call.1} parent=1 // pred_check
      _
    $region3: #{tpu_custom_call.1} parent=1 // pred_check_branch
      %9 = sbr.rel (0) target = $region5
    $region4: #{tpu_custom_call.1} parent=1 // pred_region
      %11 = vsyncadd [#allocation4], 0
      %s13 = sshll.u32 %s0, 4
      %s14 = int_to_ptr.hbm [resolvable:$true] %s13
      %s15 = sshll.u32 [#allocation3], 4
      %s16 = int_to_ptr.vmem [resolvable:$true] %s15
      %18 = dma.hbm_to_vmem [thread:$0]  %s14, 64, %s16, [#allocation4]
    $region5: #{tpu_custom_call.1} parent=1 // pred_fallthru
      _
    // Predicated region
    $region6: #{tpu_custom_call.1} parent=1 // pred_check
      _
    $region7: #{tpu_custom_call.1} parent=1 // pred_check_branch
      %20 = sbr.rel (0) target = $region9
    $region8: #{tpu_custom_call.1} parent=1 // pred_region
      %22 = dma.done [#allocation4], 64
    $region9: #{tpu_custom_call.1} parent=1 // pred_fallthru
      _
    %p23 = scmp.eq.s32.totalorder 0, 0
    // Predicated region
    $region10: #{tpu_custom_call.1} parent=1 // pred_check
      %p24 = pneg %p23
    $region11: #{tpu_custom_call.1} parent=1 // pred_check_branch
      %26 = sbr.rel (%p24) target = $region13
    $region12: #{tpu_custom_call.1} parent=1 // pred_region
      %vm27 = vcmask 123904
      %28 = vst.msk [vmem:[#allocation2] sm:$0x3] %vm27, 0.0
    $region13: #{tpu_custom_call.1} parent=1 // pred_fallthru
      _
    %v29 = vld [vmem:[#allocation3] sm:$0xf]
    %v30 = vld [vmem:[#allocation2] sm:$0x3]
    %v32 = vrot.slane %v29, 2
    %v34 = vadd.f32 %v29, %v32
    %36 = vrot.lane.b32.xlu0 %v34, 64
    %v37 = vpop.permute.xlu0 %36
    %v39 = vadd.f32 %v34, %v37
    %41 = vrot.lane.b32.xlu0 %v39, 96
    %v42 = vpop.permute.xlu0 %41
    %v44 = vadd.f32 %v39, %v42
    %46 = vrot.lane.b32.xlu0 %v44, 112
    %v47 = vpop.permute.xlu0 %46
    %v49 = vadd.f32 %v44, %v47
    %v50 = vadd.f32 %v49, 0.0
    %v51 = vadd.f32 %v30, %v50
    %vm52 = vcmask 123904
    %53 = vst.msk [vmem:[#allocation2] sm:$0x3] %vm52, %v51
    // Predicated region
    $region14: #{tpu_custom_call.1} parent=1 // pred_check
      %p54 = pneg %p23
    $region15: #{tpu_custom_call.1} parent=1 // pred_check_branch
      %56 = sbr.rel (%p54) target = $region17
    $region16: #{tpu_custom_call.1} parent=1 // pred_region
      %v57 = vld [vmem:[#allocation2] sm:$0x3]
      %v58 = vmul.f32 %v57, 0.0625
      %59 = vst.msk [vmem:[#allocation6] sm:$0x3] %vm52, %v58
    $region17: #{tpu_custom_call.1} parent=1 // pred_fallthru
      _
    // Predicated region
    $region18: #{tpu_custom_call.1} parent=1 // pred_check
      _
    $region19: #{tpu_custom_call.1} parent=1 // pred_check_branch
      %61 = sbr.rel (0) target = $region21
    $region20: #{tpu_custom_call.1} parent=1 // pred_region
      %63 = vsyncadd [#allocation5], 0
      %s65 = sshll.u32 [#allocation6], 4
      %s66 = int_to_ptr.vmem [resolvable:$true] %s65
      %s67 = sshll.u32 %s1, 4
      %s68 = int_to_ptr.hbm [resolvable:$true] %s67
      %70 = dma.vmem_to_hbm [thread:$0]  %s66, 32, %s68, [#allocation5]
    $region21: #{tpu_custom_call.1} parent=1 // pred_fallthru
      _
    // Predicated region
    $region22: #{tpu_custom_call.1} parent=1 // pred_check
      _
    $region23: #{tpu_custom_call.1} parent=1 // pred_check_branch
      %72 = sbr.rel (0) target = $region25
    $region24: #{tpu_custom_call.1} parent=1 // pred_region
      %74 = dma.done [#allocation5], 32
    $region25: #{tpu_custom_call.1} parent=1 // pred_fallthru
      _
    %75 = vsyncpa [#allocation4], 1
    %76 = vsyncpa [#allocation5], 1

</llo_original>
